<compile_context>
chip_gen: v6e
topology: v6e:2x2x1
jax: 0.10.0
libtpu: 0.0.40
codegen_flags: <defaults>
</compile_context>

<pallas_src>
import functools

import jax
import jax.numpy as jnp
import numpy as np
from jax.experimental import pallas as pl
from jax.experimental.pallas import tpu as pltpu


def _distill_kernel(s_ref, t_ref, y_ref, out_ref, *,
                    temperature: float, batch: int, tile_b: int,
                    steps_per_core: int, needs_mask: bool):
    core = pl.program_id(0)    # parallel axis (megacore on v7x)
    step = pl.program_id(1)    # batch-tile reduction axis ("arbitrary")

    @pl.when(step == 0)
    def _():
        out_ref[...] = jnp.zeros_like(out_ref)

    # Upcast inside the kernel (inputs may be bf16 in HBM).
    s = s_ref[...].astype(jnp.float32)   # student logits, class-major (C, TB)
    t = t_ref[...].astype(jnp.float32)   # teacher logits          (C, TB)
    y = y_ref[...].astype(jnp.float32)   # targets                 (C, TB)

    # ---- hard loss partial: BCEWithLogitsLoss element-sum --------------------
    #   l = max(x, 0) - x*y + log(1 + exp(-|x|))
    bce = jnp.maximum(s, 0.0) - s * y + jnp.log1p(jnp.exp(-jnp.abs(s)))
    bce_cols = jnp.sum(bce, axis=0, keepdims=True)               # (1, TB)

    # ---- soft loss partial: KL( softmax(cat[t,-t]/T) || log_softmax(cat[s,-s]/T) )
    # Collapsed per-sample form:
    #   kl = sum_j (p+_j - p-_j)(b_j - a_j) + (lse_s - lse_t)
    inv_T = 1.0 / temperature
    a = s * inv_T
    b = t * inv_T

    # Merged +/- reductions: max(max(a), max(-a)) == max(|a|), single reduce.
    m_s = jnp.max(jnp.abs(a), axis=0, keepdims=True)             # (1, TB)
    z_s = jnp.sum(jnp.exp(a - m_s) + jnp.exp(-a - m_s), axis=0, keepdims=True)
    lse_s = m_s + jnp.log(z_s)

    m_t = jnp.max(jnp.abs(b), axis=0, keepdims=True)
    e_p = jnp.exp(b - m_t)
    e_m = jnp.exp(-b - m_t)
    z_t = jnp.sum(e_p + e_m, axis=0, keepdims=True)
    lse_t = m_t + jnp.log(z_t)

    num = jnp.sum((e_p - e_m) * (b - a), axis=0, keepdims=True)  # (1, TB)
    kl_cols = num * pl.reciprocal(z_t, approx=False) + (lse_s - lse_t)

    if needs_mask:
        # Only emitted when the padded grid over-covers B (trace-time choice).
        # Lane-select on per-sample rows; garbage / duplicated columns are
        # discarded by the select, so no full-tile sanitization is needed.
        tile = core * steps_per_core + step
        col = tile * tile_b + jax.lax.broadcasted_iota(jnp.int32, (1, tile_b), 1)
        valid = col < batch
        bce_cols = jnp.where(valid, bce_cols, 0.0)
        kl_cols = jnp.where(valid, kl_cols, 0.0)

    h = jnp.sum(bce_cols, keepdims=True)    # (1, 1) raw hard partial sum
    k = jnp.sum(kl_cols, keepdims=True)     # (1, 1) raw soft partial sum

    # Lane-padded packed output: lane 0 = hard partial, lane 1 = soft partial.
    lanes = jax.lax.broadcasted_iota(jnp.int32, (1, 1, 128), 2)
    contrib = jnp.where(lanes == 0, h, 0.0) + jnp.where(lanes == 1, k, 0.0)
    out_ref[...] += contrib


def _vmem_capacity_bytes() -> int:
    try:
        return int(pltpu.get_tpu_info().vmem_capacity_bytes)
    except Exception:
        return 64 << 20     # conservative per-TC default (v7x)


def _choose_tile_b(B: int, C: int, itemsize: int) -> int:
    """Largest batch (lane) tile keeping inputs + f32 intermediates in VMEM."""
    if B <= 256:
        return B                                   # single full tile
    budget = min(_vmem_capacity_bytes() // 4, 24 << 20)
    # 3 inputs x 2 pipeline buffers + ~12 live (C, TB) f32 temporaries.
    per_col = C * (3 * 2 * itemsize + 12 * 4)
    tb = budget // max(per_col, 1)
    tb = min(tb, (B + 1) // 2)                     # >= 2 tiles so both TCs work
    tb = max(128, (tb // 128) * 128)               # lane dim multiple of 128
    return int(tb)


def distillation_loss(student_logits, teacher_logits, targets, *,
                      temperature: float = 4.0,
                      alpha_hard: float = 0.3,
                      alpha_soft: float = 0.7,
                      tile_b: int | None = None,
                      num_cores: int = 2):
    """Pallas TPU implementation of DistillationLoss.forward."""
    B, C = student_logits.shape
    itemsize = jnp.dtype(student_logits.dtype).itemsize

    # Class-major layout: batch on the 128-lane axis (full lane packing for
    # small C); per-sample reductions become sublane (axis-0) reductions.
    sT = student_logits.T
    tT = teacher_logits.T
    yT = targets.T

    if tile_b is None:
        TB = _choose_tile_b(B, C, itemsize)
    else:
        TB = min(int(tile_b), B)
        if TB < B:
            TB = max(128, (TB // 128) * 128)

    n_tiles = (B + TB - 1) // TB
    nc = max(1, min(int(num_cores), n_tiles))
    steps = (n_tiles + nc - 1) // nc
    needs_mask = (nc * steps * TB != B)
    last_tile = n_tiles - 1

    kernel = functools.partial(
        _distill_kernel,
        temperature=float(temperature),
        batch=B, tile_b=TB, steps_per_core=steps, needs_mask=needs_mask)

    def _in_map(core, step):
        # Clamp fully out-of-range tiles (odd split over cores) to the last
        # real tile; their contribution is zeroed by the lane mask.
        return (0, jnp.minimum(core * steps + step, last_tile))

    in_spec = pl.BlockSpec((C, TB), _in_map)
    out_spec = pl.BlockSpec((1, 1, 128), lambda core, step: (core, 0, 0))
    out_shape = jax.ShapeDtypeStruct((nc, 1, 128), jnp.float32)

    live_bytes = C * TB * (3 * 2 * itemsize + 12 * 4) + (1 << 16)
    vmem_cap = _vmem_capacity_bytes()
    vmem_limit = int(min(int(vmem_cap * 0.9),
                         max(int(live_bytes * 1.25), 32 << 20)))

    cost = pl.CostEstimate(
        flops=int(25 * B * C),
        transcendentals=int(5 * B * C),
        bytes_accessed=int(3 * B * C * itemsize + nc * 128 * 4),
    )

    partials = pl.pallas_call(
        kernel,
        grid=(nc, steps),
        in_specs=[in_spec, in_spec, in_spec],
        out_specs=out_spec,
        out_shape=out_shape,
        compiler_params=pltpu.CompilerParams(
            dimension_semantics=("parallel", "arbitrary"),
            vmem_limit_bytes=vmem_limit),
        cost_estimate=cost,
    )(sT, tT, yT)

    # Cross-core reduction + scalar normalization / alpha mixing (wrapper side).
    hard = partials[:, 0, 0].sum() / (B * C)
    soft = partials[:, 0, 1].sum() * (temperature ** 2) / B
    total = alpha_hard * hard + alpha_soft * soft
    return {"total_loss": total, "hard_loss": hard, "soft_loss": soft}


def _reference(student_logits, teacher_logits, targets, *,
               temperature=4.0, alpha_hard=0.3, alpha_soft=0.7):
    """Pure-JAX reference mirroring the PyTorch module (for verification)."""
    s = student_logits.astype(jnp.float32)
    t = teacher_logits.astype(jnp.float32)
    y = targets.astype(jnp.float32)
    B = s.shape[0]

    bce = jnp.maximum(s, 0.0) - s * y + jnp.log1p(jnp.exp(-jnp.abs(s)))
    hard = jnp.mean(bce)

    s2 = jnp.concatenate([s, -s], axis=1) / temperature
    t2 = jnp.concatenate([t, -t], axis=1) / temperature
    log_q = jax.nn.log_softmax(s2, axis=1)
    p = jax.nn.softmax(t2, axis=1)
    soft = jnp.sum(p * (jnp.log(p) - log_q)) / B * temperature ** 2

    total = alpha_hard * hard + alpha_soft * soft
    return {"total_loss": total, "hard_loss": hard, "soft_loss": soft}


if __name__ == "__main__":
    def make(B, C, key):
        k1, k2, k3 = jax.random.split(key, 3)
        s = jax.random.normal(k1, (B, C), dtype=jnp.float32)
        t = jax.random.normal(k2, (B, C), dtype=jnp.float32)
        y = jax.random.bernoulli(k3, p=0.5, shape=(B, C)).astype(jnp.float32)
        return s, t, y

    def check(out, ref):
        out = jax.tree_util.tree_map(jax.block_until_ready, out)
        for k in ("total_loss", "hard_loss", "soft_loss"):
            np.testing.assert_allclose(np.asarray(out[k]), np.asarray(ref[k]),
                                       rtol=1e-4, atol=1e-4)

    # 1) Small multi-label setup: 20 samples x 8 binary logits
    #    (single full tile, no masking, single-core slice).
    s, t, y = make(20, 8, jax.random.PRNGKey(0))
    check(distillation_loss(s, t, y), _reference(s, t, y))

    # 2) Two batch tiles across the 2-core parallel axis with a ragged
    #    (partially out-of-bounds, lane-masked) last tile.
    s2, t2, y2 = make(200, 8, jax.random.PRNGKey(1))
    check(distillation_loss(s2, t2, y2, tile_b=128), _reference(s2, t2, y2))

    # 3) Three batch tiles over 2 cores: exercises the clamped, fully-masked
    #    duplicate tile on the second core plus the wrapper-side reduction.
    s3, t3, y3 = make(384, 8, jax.random.PRNGKey(2))
    check(distillation_loss(s3, t3, y3, tile_b=128), _reference(s3, t3, y3))

    print("KERNEL_OK")
</pallas_src>

<mosaic_0001>
module attributes {stable_mosaic.version = 11 : i64} {
  func.func @_distill_kernel(%arg0: i32, %arg1: i32, %arg2: memref<8x20xf32, #tpu.memory_space<vmem>>, %arg3: memref<8x20xf32, #tpu.memory_space<vmem>>, %arg4: memref<8x20xf32, #tpu.memory_space<vmem>>, %arg5: memref<1x1x128xf32, #tpu.memory_space<vmem>>) attributes {dimension_semantics = [#tpu.dimension_semantics<parallel>, #tpu.dimension_semantics<arbitrary>], iteration_bounds = array<i64: 1, 1>, scalar_prefetch = 0 : i64, scratch_operands = 0 : i64, tpu.core_type = #tpu.core_type<tc>, window_params = [{transform_indices = @transform_0, window_bounds = array<i64: 8, 20>}, {transform_indices = @transform_1, window_bounds = array<i64: 8, 20>}, {transform_indices = @transform_2, window_bounds = array<i64: 8, 20>}, {transform_indices = @transform_3, window_bounds = array<i64: 1, 1, 128>}]} {
    %c0_i32 = arith.constant 0 : i32
    %0 = arith.cmpi eq, %arg1, %c0_i32 : i32
    %1 = arith.extui %0 : i1 to i32
    %c0_i32_0 = arith.constant 0 : i32
    %2 = arith.cmpi ne, %1, %c0_i32_0 : i32
    scf.if %2 {
      %cst_28 = arith.constant 0.000000e+00 : f32
      %90 = vector.broadcast %cst_28 : f32 to vector<1x1x128xf32>
      %c0_29 = arith.constant 0 : index
      %c0_30 = arith.constant 0 : index
      %c0_31 = arith.constant 0 : index
      %91 = vector.load %arg5[%c0_29, %c0_30, %c0_31] : memref<1x1x128xf32, #tpu.memory_space<vmem>>, vector<1x1x128xf32>
      tpu.vector_store %arg5[%c0_29, %c0_30, %c0_31], %90 {strides = array<i32>} : memref<1x1x128xf32, #tpu.memory_space<vmem>>, vector<1x1x128xf32>,
    } else {
    }
    %c0 = arith.constant 0 : index
    %c0_1 = arith.constant 0 : index
    %3 = vector.load %arg2[%c0, %c0_1] : memref<8x20xf32, #tpu.memory_space<vmem>>, vector<8x20xf32>
    %c0_2 = arith.constant 0 : index
    %c0_3 = arith.constant 0 : index
    %4 = vector.load %arg3[%c0_2, %c0_3] : memref<8x20xf32, #tpu.memory_space<vmem>>, vector<8x20xf32>
    %c0_4 = arith.constant 0 : index
    %c0_5 = arith.constant 0 : index
    %5 = vector.load %arg4[%c0_4, %c0_5] : memref<8x20xf32, #tpu.memory_space<vmem>>, vector<8x20xf32>
    %cst = arith.constant 0.000000e+00 : f32
    %6 = vector.broadcast %cst : f32 to vector<8x20xf32>
    %7 = arith.maximumf %3, %6 : vector<8x20xf32>
    %8 = arith.mulf %3, %5 : vector<8x20xf32>
    %9 = arith.subf %7, %8 : vector<8x20xf32>
    %10 = math.absf %3 : vector<8x20xf32>
    %cst_6 = arith.constant 0.000000e+00 : f32
    %11 = vector.broadcast %cst_6 : f32 to vector<8x20xf32>
    %12 = arith.subf %11, %10 : vector<8x20xf32>
    %13 = math.exp %12 : vector<8x20xf32>
    %14 = math.log1p %13 : vector<8x20xf32>
    %15 = arith.addf %9, %14 : vector<8x20xf32>
    %cst_7 = arith.constant dense<0.000000e+00> : vector<20xf32>
    %16 = vector.multi_reduction <add>, %15, %cst_7 [0] : vector<8x20xf32> to vector<20xf32>
    %17 = vector.shape_cast %16 : vector<20xf32> to vector<1x20xf32>
    %cst_8 = arith.constant 2.500000e-01 : f32
    %18 = vector.broadcast %cst_8 : f32 to vector<8x20xf32>
    %19 = arith.mulf %3, %18 : vector<8x20xf32>
    %cst_9 = arith.constant 2.500000e-01 : f32
    %20 = vector.broadcast %cst_9 : f32 to vector<8x20xf32>
    %21 = arith.mulf %4, %20 : vector<8x20xf32>
    %22 = math.absf %19 : vector<8x20xf32>
    %cst_10 = arith.constant dense<0xFF800000> : vector<20xf32>
    %23 = vector.multi_reduction <maximumf>, %22, %cst_10 [0] : vector<8x20xf32> to vector<20xf32>
    %24 = vector.shape_cast %23 : vector<20xf32> to vector<1x20xf32>
    %25 = vector.broadcast %24 : vector<1x20xf32> to vector<8x20xf32>
    %26 = arith.subf %19, %25 : vector<8x20xf32>
    %27 = math.exp %26 : vector<8x20xf32>
    %cst_11 = arith.constant 0.000000e+00 : f32
    %28 = vector.broadcast %cst_11 : f32 to vector<8x20xf32>
    %29 = arith.subf %28, %19 : vector<8x20xf32>
    %30 = vector.broadcast %24 : vector<1x20xf32> to vector<8x20xf32>
    %31 = arith.subf %29, %30 : vector<8x20xf32>
    %32 = math.exp %31 : vector<8x20xf32>
    %33 = arith.addf %27, %32 : vector<8x20xf32>
    %cst_12 = arith.constant dense<0.000000e+00> : vector<20xf32>
    %34 = vector.multi_reduction <add>, %33, %cst_12 [0] : vector<8x20xf32> to vector<20xf32>
    %35 = vector.shape_cast %34 : vector<20xf32> to vector<1x20xf32>
    %36 = math.log %35 : vector<1x20xf32>
    %37 = arith.addf %24, %36 : vector<1x20xf32>
    %38 = math.absf %21 : vector<8x20xf32>
    %cst_13 = arith.constant dense<0xFF800000> : vector<20xf32>
    %39 = vector.multi_reduction <maximumf>, %38, %cst_13 [0] : vector<8x20xf32> to vector<20xf32>
    %40 = vector.shape_cast %39 : vector<20xf32> to vector<1x20xf32>
    %41 = vector.broadcast %40 : vector<1x20xf32> to vector<8x20xf32>
    %42 = arith.subf %21, %41 : vector<8x20xf32>
    %43 = math.exp %42 : vector<8x20xf32>
    %cst_14 = arith.constant 0.000000e+00 : f32
    %44 = vector.broadcast %cst_14 : f32 to vector<8x20xf32>
    %45 = arith.subf %44, %21 : vector<8x20xf32>
    %46 = vector.broadcast %40 : vector<1x20xf32> to vector<8x20xf32>
    %47 = arith.subf %45, %46 : vector<8x20xf32>
    %48 = math.exp %47 : vector<8x20xf32>
    %49 = arith.addf %43, %48 : vector<8x20xf32>
    %cst_15 = arith.constant dense<0.000000e+00> : vector<20xf32>
    %50 = vector.multi_reduction <add>, %49, %cst_15 [0] : vector<8x20xf32> to vector<20xf32>
    %51 = vector.shape_cast %50 : vector<20xf32> to vector<1x20xf32>
    %52 = math.log %51 : vector<1x20xf32>
    %53 = arith.addf %40, %52 : vector<1x20xf32>
    %54 = arith.subf %43, %48 : vector<8x20xf32>
    %55 = arith.subf %21, %19 : vector<8x20xf32>
    %56 = arith.mulf %54, %55 : vector<8x20xf32>
    %cst_16 = arith.constant dense<0.000000e+00> : vector<20xf32>
    %57 = vector.multi_reduction <add>, %56, %cst_16 [0] : vector<8x20xf32> to vector<20xf32>
    %58 = vector.shape_cast %57 : vector<20xf32> to vector<1x20xf32>
    %59 = tpu.reciprocal %51 : vector<1x20xf32> -> vector<1x20xf32>
    %60 = arith.mulf %58, %59 : vector<1x20xf32>
    %61 = arith.subf %37, %53 : vector<1x20xf32>
    %62 = arith.addf %60, %61 : vector<1x20xf32>
    %63 = vector.shape_cast %17 : vector<1x20xf32> to vector<1x1x20xf32>
    %cst_17 = arith.constant dense<0.000000e+00> : vector<1xf32>
    %64 = vector.multi_reduction <add>, %63, %cst_17 [1, 2] : vector<1x1x20xf32> to vector<1xf32>
    %65 = vector.shape_cast %64 : vector<1xf32> to vector<1x1x1xf32>
    %66 = vector.extract %65[0, 0, 0] : f32 from vector<1x1x1xf32>
    %67 = vector.broadcast %66 : f32 to vector<1x1xf32>
    %68 = vector.shape_cast %62 : vector<1x20xf32> to vector<1x1x20xf32>
    %cst_18 = arith.constant dense<0.000000e+00> : vector<1xf32>
    %69 = vector.multi_reduction <add>, %68, %cst_18 [1, 2] : vector<1x1x20xf32> to vector<1xf32>
    %70 = vector.shape_cast %69 : vector<1xf32> to vector<1x1x1xf32>
    %71 = vector.extract %70[0, 0, 0] : f32 from vector<1x1x1xf32>
    %72 = vector.broadcast %71 : f32 to vector<1x1xf32>
    %73 = tpu.iota {dimensions = array<i32: 2>} : vector<1x1x128xi32>
    %c0_i32_19 = arith.constant 0 : i32
    %74 = vector.broadcast %c0_i32_19 : i32 to vector<1x1x128xi32>
    %75 = arith.cmpi eq, %73, %74 : vector<1x1x128xi32>
    %cst_20 = arith.constant 0.000000e+00 : f32
    %76 = vector.shape_cast %67 : vector<1x1xf32> to vector<1x1x1xf32>
    %77 = vector.broadcast %76 : vector<1x1x1xf32> to vector<1x1x128xf32>
    %78 = vector.broadcast %cst_20 : f32 to vector<1x1x128xf32>
    %79 = arith.select %75, %77, %78 : vector<1x1x128xi1>, vector<1x1x128xf32>
    %c1_i32 = arith.constant 1 : i32
    %80 = vector.broadcast %c1_i32 : i32 to vector<1x1x128xi32>
    %81 = arith.cmpi eq, %73, %80 : vector<1x1x128xi32>
    %cst_21 = arith.constant 0.000000e+00 : f32
    %82 = vector.shape_cast %72 : vector<1x1xf32> to vector<1x1x1xf32>
    %83 = vector.broadcast %82 : vector<1x1x1xf32> to vector<1x1x128xf32>
    %84 = vector.broadcast %cst_21 : f32 to vector<1x1x128xf32>
    %85 = arith.select %81, %83, %84 : vector<1x1x128xi1>, vector<1x1x128xf32>
    %86 = arith.addf %79, %85 : vector<1x1x128xf32>
    %c0_22 = arith.constant 0 : index
    %c0_23 = arith.constant 0 : index
    %c0_24 = arith.constant 0 : index
    %87 = vector.load %arg5[%c0_22, %c0_23, %c0_24] : memref<1x1x128xf32, #tpu.memory_space<vmem>>, vector<1x1x128xf32>
    %88 = arith.addf %87, %86 : vector<1x1x128xf32>
    %c0_25 = arith.constant 0 : index
    %c0_26 = arith.constant 0 : index
    %c0_27 = arith.constant 0 : index
    %89 = vector.load %arg5[%c0_25, %c0_26, %c0_27] : memref<1x1x128xf32, #tpu.memory_space<vmem>>, vector<1x1x128xf32>
    tpu.vector_store %arg5[%c0_25, %c0_26, %c0_27], %88 {strides = array<i32>} : memref<1x1x128xf32, #tpu.memory_space<vmem>>, vector<1x1x128xf32>,
    return
  }
  func.func @transform_0(%arg0: i32, %arg1: i32) -> (i32, i32) {
    %c1_i32 = arith.constant 1 : i32
    %0 = arith.muli %arg0, %c1_i32 : i32
    %1 = arith.addi %0, %arg1 : i32
    %c0_i32 = arith.constant 0 : i32
    %2 = arith.minsi %1, %c0_i32 : i32
    %c0_i32_0 = arith.constant 0 : i32
    %c0_i32_1 = arith.constant 0 : i32
    return %c0_i32_0, %2 : i32, i32
  }
  func.func @transform_1(%arg0: i32, %arg1: i32) -> (i32, i32) {
    %c1_i32 = arith.constant 1 : i32
    %0 = arith.muli %arg0, %c1_i32 : i32
    %1 = arith.addi %0, %arg1 : i32
    %c0_i32 = arith.constant 0 : i32
    %2 = arith.minsi %1, %c0_i32 : i32
    %c0_i32_0 = arith.constant 0 : i32
    %c0_i32_1 = arith.constant 0 : i32
    return %c0_i32_0, %2 : i32, i32
  }
  func.func @transform_2(%arg0: i32, %arg1: i32) -> (i32, i32) {
    %c1_i32 = arith.constant 1 : i32
    %0 = arith.muli %arg0, %c1_i32 : i32
    %1 = arith.addi %0, %arg1 : i32
    %c0_i32 = arith.constant 0 : i32
    %2 = arith.minsi %1, %c0_i32 : i32
    %c0_i32_0 = arith.constant 0 : i32
    %c0_i32_1 = arith.constant 0 : i32
    return %c0_i32_0, %2 : i32, i32
  }
  func.func @transform_3(%arg0: i32, %arg1: i32) -> (i32, i32, i32) {
    %c0_i32 = arith.constant 0 : i32
    %c0_i32_0 = arith.constant 0 : i32
    %c0_i32_1 = arith.constant 0 : i32
    return %arg0, %c0_i32, %c0_i32_0 : i32, i32, i32
  }
}

</mosaic_0001>

<llo_original>
// kernel: tpu_custom_call.1
$region0: #{tpu_custom_call.1}
  #allocation0 [shape = 'u32[]', space=smem, size = 0x4, offset = 0x4, fixed_abs, tag = 'smem constant byte address 0x4 - core index']
  #allocation1 [shape = 'u32[144,128]{1,0:T(1,128)}', space=vmem, size = 0x12000, scoped, tag = 'internal scratch']
  %s0 = inlined_call_operand.hbm [shape: f32[8,20], index: 0, kind: input, shape index: {}]
  %s1 = inlined_call_operand.hbm [shape: f32[8,20], index: 1, kind: input, shape index: {}]
  %s2 = inlined_call_operand.hbm [shape: f32[8,20], index: 2, kind: input, shape index: {}]
  %s3 = inlined_call_operand.hbm [shape: f32[1,1,128], index: 3, kind: output, shape index: {}]
  %s4 = sld [smem:[#allocation0]]
  $region38: #{tpu_custom_call.1} parent=0
    _
  %s6 = ssub.s32 1, %s4
  %s7 = scalar_select 0, %s6, %s4
  $region1: #{tpu_custom_call.1} parent=0
    #allocation2 [shape = 'u8[4096]{0}', space=vmem, size = 0x1000, scoped, tag = 'input window, operand 0, single buffered']
    #allocation3 [shape = 's32[1]{0}', space=sflag, size = 0x4, scoped, tag = 'scoped memory for tpu_custom_call.1']
    #allocation4 [shape = 's32[1]{0}', space=sflag, size = 0x4, scoped, tag = 'scoped memory for tpu_custom_call.1']
    #allocation5 [shape = 'u8[4096]{0}', space=vmem, size = 0x1000, scoped, tag = 'input window, operand 1, single buffered']
    #allocation6 [shape = 's32[1]{0}', space=sflag, size = 0x4, scoped, tag = 'scoped memory for tpu_custom_call.1']
    #allocation7 [shape = 'u8[4096]{0}', space=vmem, size = 0x1000, scoped, tag = 'input window, operand 2, single buffered']
    #allocation8 [shape = 'u8[512]{0}', space=vmem, size = 0x400, scoped, tag = 'output window, operand 0, single buffered']
    %8 = vsyncpa [#allocation3], 0
    %9 = vsyncpa [#allocation6], 0
    %10 = vsyncpa [#allocation4], 0
    // Predicated region
    $region2: #{tpu_custom_call.1} parent=1 // pred_check
      _
    $region3: #{tpu_custom_call.1} parent=1 // pred_check_branch
      %12 = sbr.rel (0) target = $region5
    $region4: #{tpu_custom_call.1} parent=1 // pred_region
      %s13 = sadd.s32 0, 0
      %p14 = scmp.lt.s32.totalorder %s13, 0
      %s15 = scalar_select %p14, %s13, 0
      %s17 = ssub.s32 128, 128
      %18 = vsyncadd [#allocation3], %s17
      %s19 = smul.addr %s15, 128
      %s20 = scalar_lea.hbm %s0, %s19
      %s22 = sshll.u32 [#allocation2], 4
      %s23 = int_to_ptr.vmem [resolvable:$true] %s22
      %25 = dma.hbm_to_vmem [thread:$0]  %s20, 128, %s23, [#allocation3]
    $region5: #{tpu_custom_call.1} parent=1 // pred_fallthru
      _
    // Predicated region
    $region6: #{tpu_custom_call.1} parent=1 // pred_check
      _
    $region7: #{tpu_custom_call.1} parent=1 // pred_check_branch
      %27 = sbr.rel (0) target = $region9
    $region8: #{tpu_custom_call.1} parent=1 // pred_region
      %s28 = sadd.s32 0, 0
      %p29 = scmp.lt.s32.totalorder %s28, 0
      %s30 = scalar_select %p29, %s28, 0
      %s32 = ssub.s32 128, 128
      %33 = vsyncadd [#allocation6], %s32
      %s34 = smul.addr %s30, 128
      %s35 = scalar_lea.hbm %s1, %s34
      %s37 = sshll.u32 [#allocation5], 4
      %s38 = int_to_ptr.vmem [resolvable:$true] %s37
      %40 = dma.hbm_to_vmem [thread:$0]  %s35, 128, %s38, [#allocation6]
    $region9: #{tpu_custom_call.1} parent=1 // pred_fallthru
      _
    // Predicated region
    $region10: #{tpu_custom_call.1} parent=1 // pred_check
      _
    $region11: #{tpu_custom_call.1} parent=1 // pred_check_branch
      %42 = sbr.rel (0) target = $region13
    $region12: #{tpu_custom_call.1} parent=1 // pred_region
      %s43 = sadd.s32 0, 0
      %p44 = scmp.lt.s32.totalorder %s43, 0
      %s45 = scalar_select %p44, %s43, 0
      %s47 = ssub.s32 128, 128
      %48 = vsyncadd [#allocation6], %s47
      %s49 = smul.addr %s45, 128
      %s50 = scalar_lea.hbm %s2, %s49
      %s52 = sshll.u32 [#allocation7], 4
      %s53 = int_to_ptr.vmem [resolvable:$true] %s52
      %55 = dma.hbm_to_vmem [thread:$0]  %s50, 128, %s53, [#allocation6]
    $region13: #{tpu_custom_call.1} parent=1 // pred_fallthru
      _
    // Predicated region
    $region14: #{tpu_custom_call.1} parent=1 // pred_check
      _
    $region15: #{tpu_custom_call.1} parent=1 // pred_check_branch
      %57 = sbr.rel (0) target = $region17
    $region16: #{tpu_custom_call.1} parent=1 // pred_region
      %58 = dma.done [#allocation3], 128
    $region17: #{tpu_custom_call.1} parent=1 // pred_fallthru
      _
    // Predicated region
    $region18: #{tpu_custom_call.1} parent=1 // pred_check
      _
    $region19: #{tpu_custom_call.1} parent=1 // pred_check_branch
      %60 = sbr.rel (0) target = $region21
    $region20: #{tpu_custom_call.1} parent=1 // pred_region
      %61 = dma.done [#allocation6], 128
    $region21: #{tpu_custom_call.1} parent=1 // pred_fallthru
      _
    // Predicated region
    $region22: #{tpu_custom_call.1} parent=1 // pred_check
      _
    $region23: #{tpu_custom_call.1} parent=1 // pred_check_branch
      %63 = sbr.rel (0) target = $region25
    $region24: #{tpu_custom_call.1} parent=1 // pred_region
      %64 = dma.done [#allocation6], 128
    $region25: #{tpu_custom_call.1} parent=1 // pred_fallthru
      _
    %s65 = sadd.s32 0, 0
    %p66 = scmp.lt.s32.totalorder %s65, 0
    %s67 = scalar_select %p66, %s65, 0
    %s68 = sadd.s32 0, 0
    %p69 = scmp.lt.s32.totalorder %s68, 0
    %s70 = scalar_select %p69, %s68, 0
    %s71 = sadd.s32 0, 0
    %p72 = scmp.lt.s32.totalorder %s71, 0
    %s73 = scalar_select %p72, %s71, 0
    %p74 = scmp.eq.s32.totalorder 0, 0
    // Predicated region
    $region26: #{tpu_custom_call.1} parent=1 // pred_check
      %p75 = pneg %p74
    $region27: #{tpu_custom_call.1} parent=1 // pred_check_branch
      %77 = sbr.rel (%p75) target = $region29
    $region28: #{tpu_custom_call.1} parent=1 // pred_region
      %78 = vst [vmem:[#allocation8] sm:$0x1] 0.0
    $region29: #{tpu_custom_call.1} parent=1 // pred_fallthru
      _
    %v79 = vld [vmem:[#allocation2] sm:$0xff]
    %v80 = vld [vmem:[#allocation5] sm:$0xff]
    %v81 = vld [vmem:[#allocation7] sm:$0xff]
    %v82 = vmax.f32 %v79, 0.0
    %v83 = vmul.f32 %v79, %v81
    %v84 = vsub.f32 %v82, %v83
    %v85 = vand.u32 2147483647, %v79
    %v86 = vsub.f32 0.0, %v85
    %v87 = vmul.f32 %v86, 1.442695
    %v88 = vpow.pop %v87
    %v89 = vadd.f32 %v88, 1.0
    %v90 = vlog2.pop %v89
    %v91 = vmul.f32 %v90, 0.6931472
    %v92 = vmul.f32 -0.5, %v88
    %v93 = vadd.f32 %v92, 1.0
    %v94 = vmul.f32 %v93, %v88
    %v95 = vand.u32 2147483647, %v88
    %vm96 = vcmp.lt.f32.partialorder %v95, 0.0004427343
    %v97 = vsel %vm96, %v94, %v91
    %v98 = vadd.f32 %v84, %v97
    %vm99 = vcmask 162816
    %v100 = vsel %vm99, %v98, 0.0
    %v101 = vrot.slane %v100, 4
    %v102 = vadd.f32 %v100, %v101
    %v103 = vrot.slane %v102, 2
    %v104 = vadd.f32 %v102, %v103
    %v105 = vrot.slane %v104, 1
    %v106 = vadd.f32 %v104, %v105
    %v107 = vmul.f32 %v79, 0.25
    %v108 = vmul.f32 %v80, 0.25
    %v109 = vand.u32 2147483647, %v107
    %v110 = vsel %vm99, %v109, -inf
    %v111 = vrot.slane %v110, 4
    %v112 = vmax.f32 %v110, %v111
    %v113 = vrot.slane %v112, 2
    %v114 = vmax.f32 %v112, %v113
    %v115 = vrot.slane %v114, 1
    %v116 = vmax.f32 %v114, %v115
    %v117 = vsub.f32 %v107, %v116
    %v118 = vmul.f32 %v117, 1.442695
    %v119 = vpow.pop %v118
    %v120 = vsub.f32 0.0, %v107
    %v121 = vsub.f32 %v120, %v116
    %v122 = vmul.f32 %v121, 1.442695
    %v123 = vpow.pop %v122
    %v124 = vadd.f32 %v119, %v123
    %v125 = vsel %vm99, %v124, 0.0
    %v126 = vrot.slane %v125, 4
    %v127 = vadd.f32 %v125, %v126
    %v128 = vrot.slane %v127, 2
    %v129 = vadd.f32 %v127, %v128
    %v130 = vrot.slane %v129, 1
    %v131 = vadd.f32 %v129, %v130
    %v132 = vlog2.pop %v131
    %v133 = vmul.f32 %v132, 0.6931472
    %v134 = vadd.f32 %v116, %v133
    %v135 = vand.u32 2147483647, %v108
    %v136 = vsel %vm99, %v135, -inf
    %v137 = vrot.slane %v136, 4
    %v138 = vmax.f32 %v136, %v137
    %v139 = vrot.slane %v138, 2
    %v140 = vmax.f32 %v138, %v139
    %v141 = vrot.slane %v140, 1
    %v142 = vmax.f32 %v140, %v141
    %v143 = vsub.f32 %v108, %v142
    %v144 = vmul.f32 %v143, 1.442695
    %v145 = vpow.pop %v144
    %v146 = vsub.f32 0.0, %v108
    %v147 = vsub.f32 %v146, %v142
    %v148 = vmul.f32 %v147, 1.442695
    %v149 = vpow.pop %v148
    %v150 = vadd.f32 %v145, %v149
    %v151 = vsel %vm99, %v150, 0.0
    %v152 = vrot.slane %v151, 4
    %v153 = vadd.f32 %v151, %v152
    %v154 = vrot.slane %v153, 2
    %v155 = vadd.f32 %v153, %v154
    %v156 = vrot.slane %v155, 1
    %v157 = vadd.f32 %v155, %v156
    %v158 = vlog2.pop %v157
    %v159 = vmul.f32 %v158, 0.6931472
    %v160 = vadd.f32 %v142, %v159
    %v161 = vsub.f32 %v145, %v149
    %v162 = vsub.f32 %v108, %v107
    %v163 = vmul.f32 %v161, %v162
    %v164 = vsel %vm99, %v163, 0.0
    %v165 = vrot.slane %v164, 4
    %v166 = vadd.f32 %v164, %v165
    %v167 = vrot.slane %v166, 2
    %v168 = vadd.f32 %v166, %v167
    %v169 = vrot.slane %v168, 1
    %v170 = vadd.f32 %v168, %v169
    %v171 = vrcp.pop %v157
    %v172 = vmul.f32 %v170, %v171
    %v173 = vsub.f32 %v134, %v160
    %v174 = vadd.f32 %v172, %v173
    %vm175 = vcmask 155648
    %v176 = vsel %vm175, %v106, 0.0
    %177 = vadd.xlane.f32.xlu0 %v176
    %v178 = vpop.xlane.xlu0 %177
    %v179 = vrot.slane %v178, 4
    %v180 = vadd.f32 %v178, %v179
    %v181 = vrot.slane %v180, 2
    %v182 = vadd.f32 %v180, %v181
    %v183 = vrot.slane %v182, 1
    %v184 = vadd.f32 %v182, %v183
    %s185 = vtos %v184
    %v186 = vsel %vm175, %v174, 0.0
    %187 = vadd.xlane.f32.xlu0 %v186
    %v188 = vpop.xlane.xlu0 %187
    %v189 = vrot.slane %v188, 4
    %v190 = vadd.f32 %v188, %v189
    %v191 = vrot.slane %v190, 2
    %v192 = vadd.f32 %v190, %v191
    %v193 = vrot.slane %v192, 1
    %v194 = vadd.f32 %v192, %v193
    %s195 = vtos %v194
    %v196 = vlaneseq
    %v197 = vand.u32 %v196, 127
    %vm198 = vcmp.eq.s32.totalorder %v197, 0
    %v199 = vstv %s185
    %v200 = vsel %vm198, %v199, 0.0
    %vm201 = vcmp.eq.s32.totalorder %v197, 1
    %v202 = vstv %s195
    %v203 = vsel %vm201, %v202, 0.0
    %v204 = vadd.f32 %v200, %v203
    %v205 = vld [vmem:[#allocation8] sm:$0x1]
    %v206 = vadd.f32 %v205, %v204
    %207 = vst [vmem:[#allocation8] sm:$0x1] %v206
    // Predicated region
    $region30: #{tpu_custom_call.1} parent=1 // pred_check
      _
    $region31: #{tpu_custom_call.1} parent=1 // pred_check_branch
      %209 = sbr.rel (0) target = $region33
    $region32: #{tpu_custom_call.1} parent=1 // pred_region
      %s211 = ssub.s32 16, 16
      %212 = vsyncadd [#allocation4], %s211
      %s214 = sshll.u32 [#allocation8], 4
      %s215 = int_to_ptr.vmem [resolvable:$true] %s214
      %217 = dma.vmem_to_hbm [thread:$0]  %s215, 16, %s3, [#allocation4]
    $region33: #{tpu_custom_call.1} parent=1 // pred_fallthru
      _
    // Predicated region
    $region34: #{tpu_custom_call.1} parent=1 // pred_check
      _
    $region35: #{tpu_custom_call.1} parent=1 // pred_check_branch
      %219 = sbr.rel (0) target = $region37
    $region36: #{tpu_custom_call.1} parent=1 // pred_region
      %220 = dma.done [#allocation4], 16
    $region37: #{tpu_custom_call.1} parent=1 // pred_fallthru
      _
    %221 = vsyncpa [#allocation3], 1
    %222 = vsyncpa [#allocation6], 1
    %223 = vsyncpa [#allocation4], 1

</llo_original>
